<compile_context>
chip_gen: v7x
topology: tpu7x:2x2x1
jax: 0.10.0
libtpu: 0.0.40
codegen_flags: <defaults>
</compile_context>

<pallas_src>
import functools
import math

import jax
import jax.numpy as jnp
from jax.experimental import pallas as pl
from jax.experimental.pallas import tpu as pltpu

_SUBLANE = 8


def _round_up(n, m):
    return ((n + m - 1) // m) * m


# ----------------------------------------------------------------------------
# Fused Pallas kernel: the whole KAN (all layers) per batch tile
# ----------------------------------------------------------------------------
def kan_fused_kernel(x_ref, *refs, num_layers, scale_base):
    # refs = (W0, bs0, W1, bs1, ..., o_ref);  bs = [bias_row; spline_row] (2, out_f)
    o_ref = refs[-1]
    h = x_ref[...]                                             # (TB, In)
    for l in range(num_layers):                                # unrolled at trace time
        w_ref, bs_ref = refs[2 * l], refs[2 * l + 1]
        w = w_ref[...]
        # True-f32 MXU passes for the f32 path (fold changes association);
        # default (single-pass) for bf16 weights.
        prec = jax.lax.Precision.HIGHEST if w.dtype == jnp.float32 else None
        z = jnp.dot(h.astype(w.dtype), w,
                    preferred_element_type=jnp.float32, precision=prec)   # (TB, Out)
        z = z + bs_ref[0:1, :]                                 # bias row (f32)
        h = (z * jax.nn.sigmoid(z)) * scale_base + bs_ref[1:2, :]  # SiLU + spline row
    o_ref[...] = h.astype(o_ref.dtype)


# ----------------------------------------------------------------------------
# Host-side preparation: fold u@v dense, fold spline into an additive row
# ----------------------------------------------------------------------------
def _prepare_kernel_params(params, *, scale_spline, weight_dtype):
    hp = jax.lax.Precision.HIGHEST
    prepared = []
    for p in params:
        u, v, bias = p["u"], p["v"], p["bias"]
        su, sv, g = p["spline_u"], p["spline_v"], p["spline_grid"]
        # Dense fold of the low-rank pair (rank is tiny; one matmul per layer).
        w = jnp.dot(u, v, precision=hp).astype(weight_dtype)           # (in_f, out_f)
        # Batch-invariant spline row: g @ sv^T @ su^T (identical for every sample).
        spline_row = jnp.dot(jnp.dot(g, sv.T, precision=hp), su.T,
                             precision=hp) * scale_spline              # (1, out_f)
        # Pack bias + spline rows into one small operand; keep f32 for accuracy.
        bs = jnp.concatenate([bias, spline_row], axis=0).astype(jnp.float32)  # (2, out_f)
        prepared.append((w, bs))
    return prepared


# ----------------------------------------------------------------------------
# Forward: single fused pallas_call, batch-tiled grid, no lane padding
# ----------------------------------------------------------------------------
def kan_forward(x, params, *, scale_base=1.0, scale_spline=1.0,
                batch_tile=1024, compute_dtype=jnp.float32):
    num_layers = len(params)
    in_f = params[0]["u"].shape[0]
    out_f = params[-1]["v"].shape[1]

    prepared = _prepare_kernel_params(params, scale_spline=scale_spline,
                                      weight_dtype=compute_dtype)

    # --- batch tiling -------------------------------------------------------
    b = x.shape[0]
    b8 = _round_up(b, _SUBLANE)
    tb = min(batch_tile, b8)
    grid = pl.cdiv(b8, tb)
    if b8 >= 2 * _SUBLANE:
        grid = max(grid, 2)                    # >=2 steps so v7x uses both TCs
    tb = _round_up(pl.cdiv(b8, grid), _SUBLANE)  # even split; tiny batch padding
    bp = grid * tb

    xc = x.astype(compute_dtype)
    if bp != b:
        xc = jnp.pad(xc, ((0, bp - b), (0, 0)))   # pad rows only (zeros, sliced off)

    flat_params = [m for layer in prepared for m in layer]
    operands = (xc, *flat_params)

    # x: batch-tiled, lane width = true in_f (full-extent last dim -> legal block).
    in_specs = [pl.BlockSpec((tb, in_f), lambda i: (i, 0))]
    # Weights / bias+spline rows: full-extent blocks with constant index_map, so
    # they are fetched once and stay resident across grid steps.
    in_specs += [pl.BlockSpec(m.shape, lambda i: (0, 0)) for m in flat_params]

    kernel = functools.partial(kan_fused_kernel, num_layers=num_layers,
                               scale_base=scale_base)

    out = pl.pallas_call(
        kernel,
        out_shape=jax.ShapeDtypeStruct((bp, out_f), compute_dtype),
        grid_spec=pltpu.PrefetchScalarGridSpec(
            num_scalar_prefetch=0,
            grid=(grid,),
            in_specs=in_specs,
            out_specs=pl.BlockSpec((tb, out_f), lambda i: (i, 0)),
        ),
        compiler_params=pltpu.CompilerParams(
            dimension_semantics=("parallel",)),   # batch axis -> both TCs on v7x
    )(*operands)

    return out[:b] if bp != b else out


# ----------------------------------------------------------------------------
# Parameter construction (mirrors the PyTorch __init__ shapes)
# ----------------------------------------------------------------------------
def init_kan_params(key, layers_hidden, *, grid_size=5, spline_order=3,
                    rank=10, factor_rank=5, grid_range=(-1.0, 1.0)):
    spline_features = grid_size + spline_order
    spline_grid = jnp.linspace(grid_range[0], grid_range[1],
                               spline_features, dtype=jnp.float32)[None, :]
    params = []
    for in_f, out_f in zip(layers_hidden, layers_hidden[1:]):
        key, k1, k2, k3, k4, k5 = jax.random.split(key, 6)

        # kaiming_uniform_(a=sqrt(5)) => uniform(-1/sqrt(fan_in), 1/sqrt(fan_in)),
        # fan_in = dim 1 of a 2-D tensor (PyTorch convention).
        def ku(k, shape):
            bound = 1.0 / math.sqrt(shape[1])
            return jax.random.uniform(k, shape, jnp.float32, -bound, bound)

        u = ku(k1, (in_f, rank))                       # LowRankLinear.u
        v = ku(k2, (rank, out_f))                      # LowRankLinear.v
        bias_bound = 1.0 / math.sqrt(rank)             # fan_in of u
        bias = jax.random.uniform(k3, (1, out_f), jnp.float32,
                                  -bias_bound, bias_bound)
        su = ku(k4, (out_f, factor_rank))              # spline_weight_u (shared)
        sv = ku(k5, (factor_rank, spline_features))    # spline_weight_v

        params.append(dict(u=u, v=v, bias=bias, spline_u=su, spline_v=sv,
                           spline_grid=spline_grid))
    return params


# ----------------------------------------------------------------------------
# Pure-JAX reference (sanity) and driver
# ----------------------------------------------------------------------------
def kan_forward_ref(x, params, *, scale_base=1.0, scale_spline=1.0):
    # TODO(synk): update_grid / regularization_loss / training-mode spline noise are
    # training-time utilities, not part of the inference forward pass; not implemented.
    hp = jax.lax.Precision.HIGHEST
    for p in params:
        z = jnp.dot(jnp.dot(x, p["u"], precision=hp), p["v"],
                    precision=hp) + p["bias"]
        base = jax.nn.silu(z) * scale_base
        spl = jnp.dot(jnp.dot(p["spline_grid"], p["spline_v"].T, precision=hp),
                      p["spline_u"].T, precision=hp)
        x = base + spl * scale_spline
    return x


if __name__ == "__main__":
    key = jax.random.PRNGKey(0)
    layers_hidden = [32, 64, 16]
    batch = 8

    kx, kp = jax.random.split(key)
    x = jax.random.normal(kx, (batch, layers_hidden[0]), dtype=jnp.float32)
    params = init_kan_params(kp, layers_hidden, grid_size=5, spline_order=3,
                             rank=10, factor_rank=5)

    ref = jax.block_until_ready(kan_forward_ref(x, params))

    # f32 path (exact: no feature padding; padded batch rows sliced off).
    out = jax.block_until_ready(kan_forward(x, params))
    assert out.shape == (batch, layers_hidden[-1])
    assert jnp.allclose(out, ref, atol=1e-4, rtol=1e-4), "f32 mismatch vs reference"

    # bf16 compute path (v6e/v7x: bf16 MXU + halved x/out HBM bytes).
    out_bf16 = jax.block_until_ready(
        kan_forward(x, params, compute_dtype=jnp.bfloat16))
    assert out_bf16.shape == (batch, layers_hidden[-1])
    assert jnp.allclose(out_bf16.astype(jnp.float32), ref, atol=5e-2, rtol=5e-2), \
        "bf16 mismatch vs reference"

    print("KERNEL_OK")
</pallas_src>

<mosaic_0001>
module attributes {stable_mosaic.version = 11 : i64} {
  func.func @kan_fused_kernel(%arg0: i32, %arg1: memref<8x32xf32, #tpu.memory_space<vmem>>, %arg2: memref<32x64xf32, #tpu.memory_space<vmem>>, %arg3: memref<2x64xf32, #tpu.memory_space<vmem>>, %arg4: memref<64x16xf32, #tpu.memory_space<vmem>>, %arg5: memref<2x16xf32, #tpu.memory_space<vmem>>, %arg6: memref<8x16xf32, #tpu.memory_space<vmem>>) attributes {dimension_semantics = [#tpu.dimension_semantics<parallel>], iteration_bounds = array<i64: 1>, scalar_prefetch = 0 : i64, scratch_operands = 0 : i64, tpu.core_type = #tpu.core_type<tc>, window_params = [{transform_indices = @transform_0, window_bounds = array<i64: 8, 32>}, {pipeline_mode = #tpu.pipeline_mode<synchronous>, transform_indices = @transform_1, window_bounds = array<i64: 32, 64>}, {pipeline_mode = #tpu.pipeline_mode<synchronous>, transform_indices = @transform_2, window_bounds = array<i64: 2, 64>}, {pipeline_mode = #tpu.pipeline_mode<synchronous>, transform_indices = @transform_3, window_bounds = array<i64: 64, 16>}, {pipeline_mode = #tpu.pipeline_mode<synchronous>, transform_indices = @transform_4, window_bounds = array<i64: 2, 16>}, {transform_indices = @transform_5, window_bounds = array<i64: 8, 16>}]} {
    %c0 = arith.constant 0 : index
    %c0_0 = arith.constant 0 : index
    %0 = vector.load %arg1[%c0, %c0_0] : memref<8x32xf32, #tpu.memory_space<vmem>>, vector<8x32xf32>
    %c0_1 = arith.constant 0 : index
    %c0_2 = arith.constant 0 : index
    %1 = vector.load %arg2[%c0_1, %c0_2] : memref<32x64xf32, #tpu.memory_space<vmem>>, vector<32x64xf32>
    %cst = arith.constant dense<0.000000e+00> : vector<8x64xf32>
    %2 = tpu.matmul %0, %1, %cst {dimension_numbers = #tpu.dot_dimension_numbers<[1], [0], [0], [1], [0, 0, 1, 1], [], []>, precision = #tpu.contract_precision<fp32>} : vector<8x32xf32>, vector<32x64xf32>, vector<8x64xf32> -> vector<8x64xf32>
    %c0_3 = arith.constant 0 : index
    %c0_4 = arith.constant 0 : index
    %3 = vector.load %arg3[%c0_3, %c0_4] : memref<2x64xf32, #tpu.memory_space<vmem>>, vector<1x64xf32>
    %4 = vector.broadcast %3 : vector<1x64xf32> to vector<8x64xf32>
    %5 = arith.addf %2, %4 : vector<8x64xf32>
    %6 = arith.negf %5 : vector<8x64xf32>
    %7 = math.exp %6 : vector<8x64xf32>
    %cst_5 = arith.constant 1.000000e+00 : f32
    %8 = vector.broadcast %cst_5 : f32 to vector<8x64xf32>
    %9 = arith.addf %8, %7 : vector<8x64xf32>
    %10 = arith.divf %8, %9 : vector<8x64xf32>
    %11 = arith.mulf %5, %10 : vector<8x64xf32>
    %cst_6 = arith.constant 1.000000e+00 : f32
    %12 = vector.broadcast %cst_6 : f32 to vector<8x64xf32>
    %13 = arith.mulf %11, %12 : vector<8x64xf32>
    %c1 = arith.constant 1 : index
    %c0_7 = arith.constant 0 : index
    %14 = vector.load %arg3[%c1, %c0_7] : memref<2x64xf32, #tpu.memory_space<vmem>>, vector<1x64xf32>
    %15 = vector.broadcast %14 : vector<1x64xf32> to vector<8x64xf32>
    %16 = arith.addf %13, %15 : vector<8x64xf32>
    %c0_8 = arith.constant 0 : index
    %c0_9 = arith.constant 0 : index
    %17 = vector.load %arg4[%c0_8, %c0_9] : memref<64x16xf32, #tpu.memory_space<vmem>>, vector<64x16xf32>
    %cst_10 = arith.constant dense<0.000000e+00> : vector<8x16xf32>
    %18 = tpu.matmul %16, %17, %cst_10 {dimension_numbers = #tpu.dot_dimension_numbers<[1], [0], [0], [1], [0, 0, 1, 1], [], []>, precision = #tpu.contract_precision<fp32>} : vector<8x64xf32>, vector<64x16xf32>, vector<8x16xf32> -> vector<8x16xf32>
    %c0_11 = arith.constant 0 : index
    %c0_12 = arith.constant 0 : index
    %19 = vector.load %arg5[%c0_11, %c0_12] : memref<2x16xf32, #tpu.memory_space<vmem>>, vector<1x16xf32>
    %20 = vector.broadcast %19 : vector<1x16xf32> to vector<8x16xf32>
    %21 = arith.addf %18, %20 : vector<8x16xf32>
    %22 = arith.negf %21 : vector<8x16xf32>
    %23 = math.exp %22 : vector<8x16xf32>
    %cst_13 = arith.constant 1.000000e+00 : f32
    %24 = vector.broadcast %cst_13 : f32 to vector<8x16xf32>
    %25 = arith.addf %24, %23 : vector<8x16xf32>
    %26 = arith.divf %24, %25 : vector<8x16xf32>
    %27 = arith.mulf %21, %26 : vector<8x16xf32>
    %cst_14 = arith.constant 1.000000e+00 : f32
    %28 = vector.broadcast %cst_14 : f32 to vector<8x16xf32>
    %29 = arith.mulf %27, %28 : vector<8x16xf32>
    %c1_15 = arith.constant 1 : index
    %c0_16 = arith.constant 0 : index
    %30 = vector.load %arg5[%c1_15, %c0_16] : memref<2x16xf32, #tpu.memory_space<vmem>>, vector<1x16xf32>
    %31 = vector.broadcast %30 : vector<1x16xf32> to vector<8x16xf32>
    %32 = arith.addf %29, %31 : vector<8x16xf32>
    %c0_17 = arith.constant 0 : index
    %c0_18 = arith.constant 0 : index
    %33 = vector.load %arg6[%c0_17, %c0_18] : memref<8x16xf32, #tpu.memory_space<vmem>>, vector<8x16xf32>
    tpu.vector_store %arg6[%c0_17, %c0_18], %32 {strides = array<i32>} : memref<8x16xf32, #tpu.memory_space<vmem>>, vector<8x16xf32>,
    return
  }
  func.func @transform_0(%arg0: i32) -> (i32, i32) {
    %c0_i32 = arith.constant 0 : i32
    %c0_i32_0 = arith.constant 0 : i32
    return %arg0, %c0_i32 : i32, i32
  }
  func.func @transform_1(%arg0: i32) -> (i32, i32) {
    %c0_i32 = arith.constant 0 : i32
    %c0_i32_0 = arith.constant 0 : i32
    %c0_i32_1 = arith.constant 0 : i32
    return %c0_i32, %c0_i32_0 : i32, i32
  }
  func.func @transform_2(%arg0: i32) -> (i32, i32) {
    %c0_i32 = arith.constant 0 : i32
    %c0_i32_0 = arith.constant 0 : i32
    %c0_i32_1 = arith.constant 0 : i32
    return %c0_i32, %c0_i32_0 : i32, i32
  }
  func.func @transform_3(%arg0: i32) -> (i32, i32) {
    %c0_i32 = arith.constant 0 : i32
    %c0_i32_0 = arith.constant 0 : i32
    %c0_i32_1 = arith.constant 0 : i32
    return %c0_i32, %c0_i32_0 : i32, i32
  }
  func.func @transform_4(%arg0: i32) -> (i32, i32) {
    %c0_i32 = arith.constant 0 : i32
    %c0_i32_0 = arith.constant 0 : i32
    %c0_i32_1 = arith.constant 0 : i32
    return %c0_i32, %c0_i32_0 : i32, i32
  }
  func.func @transform_5(%arg0: i32) -> (i32, i32) {
    %c0_i32 = arith.constant 0 : i32
    %c0_i32_0 = arith.constant 0 : i32
    return %arg0, %c0_i32 : i32, i32
  }
}

</mosaic_0001>

<llo_original>
// kernel: tpu_custom_call.1
$region0: #{tpu_custom_call.1}
  #allocation0 [shape = 'u32[]', space=smem, size = 0x4, offset = 0x4, fixed_abs, tag = 'smem constant byte address 0x4 - core index']
  #allocation1 [shape = 'u32[144,128]{1,0:T(1,128)}', space=vmem, size = 0x12000, scoped, tag = 'internal scratch']
  %s0 = inlined_call_operand.vmem [shape: f32[8,32], index: 0, kind: input, shape index: {}]
  %s1 = inlined_call_operand.vmem [shape: f32[32,64], index: 1, kind: input, shape index: {}]
  %s2 = inlined_call_operand.vmem [shape: f32[2,64], index: 2, kind: input, shape index: {}]
  %s3 = inlined_call_operand.vmem [shape: f32[64,16], index: 3, kind: input, shape index: {}]
  %s4 = inlined_call_operand.vmem [shape: f32[2,16], index: 4, kind: input, shape index: {}]
  %s5 = inlined_call_operand.hbm [shape: f32[8,16], index: 5, kind: output, shape index: {}]
  %s6 = sld [smem:[#allocation0]]
  $region30: #{tpu_custom_call.1} parent=0
    _
  %s8 = ssub.s32 1, %s6
  %s9 = scalar_select 0, %s8, %s6
  $region1: #{tpu_custom_call.1} parent=0
    #allocation2 [shape = 'u8[4096]{0}', space=vmem, size = 0x1000, scoped, tag = 'output window, operand 0, single buffered']
    #allocation3 [shape = 's32[1]{0}', space=sflag, size = 0x4, scoped, tag = 'scoped memory for tpu_custom_call.1']
    %10 = vsyncpa [#allocation3], 0
    // Predicated region
    $region2: #{tpu_custom_call.1} parent=1 // pred_check
      _
    $region3: #{tpu_custom_call.1} parent=1 // pred_check_branch
      %12 = sbr.rel (0) target = $region5
    $region4: #{tpu_custom_call.1} parent=1 // pred_region
      _
    $region5: #{tpu_custom_call.1} parent=1 // pred_fallthru
      _
    // Predicated region
    $region6: #{tpu_custom_call.1} parent=1 // pred_check
      _
    $region7: #{tpu_custom_call.1} parent=1 // pred_check_branch
      %14 = sbr.rel (0) target = $region9
    $region8: #{tpu_custom_call.1} parent=1 // pred_region
      _
    $region9: #{tpu_custom_call.1} parent=1 // pred_fallthru
      _
    // Predicated region
    $region10: #{tpu_custom_call.1} parent=1 // pred_check
      _
    $region11: #{tpu_custom_call.1} parent=1 // pred_check_branch
      %16 = sbr.rel (0) target = $region13
    $region12: #{tpu_custom_call.1} parent=1 // pred_region
      _
    $region13: #{tpu_custom_call.1} parent=1 // pred_fallthru
      _
    // Predicated region
    $region14: #{tpu_custom_call.1} parent=1 // pred_check
      _
    $region15: #{tpu_custom_call.1} parent=1 // pred_check_branch
      %18 = sbr.rel (0) target = $region17
    $region16: #{tpu_custom_call.1} parent=1 // pred_region
      _
    $region17: #{tpu_custom_call.1} parent=1 // pred_fallthru
      _
    // Predicated region
    $region18: #{tpu_custom_call.1} parent=1 // pred_check
      _
    $region19: #{tpu_custom_call.1} parent=1 // pred_check_branch
      %20 = sbr.rel (0) target = $region21
    $region20: #{tpu_custom_call.1} parent=1 // pred_region
      _
    $region21: #{tpu_custom_call.1} parent=1 // pred_fallthru
      _
    %v21 = vld [vmem:[%s0] sm:$0xff]
    %v22 = vld [vmem:[%s1] sm:$0xff]
    %v23 = vld [vmem:[%s1 + $0x8] sm:$0xff]
    %v24 = vld [vmem:[%s1 + $0x10] sm:$0xff]
    %v25 = vld [vmem:[%s1 + $0x18] sm:$0xff]
    %v26 = vld [vmem:[%s2] sm:$0x1]
    %v27 = vlaneseq
    %v28 = vshrl.u32 %v27, 7
    %v29 = vsub.s32 0, %v28
    %v30 = vrot.slane %v26, %v29
    %vm31 = vcmask 261120
    %v33 = vsel %vm31, %v21, 0
    %35 = vmatprep.subr.mxu0 0.0
    %v36 = vand.u32 %v22, 4294901760
    %37 = vmatpush1.msra.mxu0 %v36
    %38 = vmatprep.subr.mxu0 0.0
    %v39 = vand.u32 %v23, 4294901760
    %40 = vmatpush1.msra.mxu0 %v39
    %41 = vmatprep.subr.mxu0 0.0
    %v42 = vand.u32 %v24, 4294901760
    %43 = vmatpush1.msra.mxu0 %v42
    %44 = vmatprep.subr.mxu0 0.0
    %v45 = vand.u32 %v25, 4294901760
    %46 = vmatpush1.msra.mxu0 %v45
    %47 = vmatprep.subr.mxu0 0.0
    %48 = vmatpush1.msra.mxu0 0.0
    %49 = vmatprep.subr.mxu0 0.0
    %50 = vmatpush1.msra.mxu0 0.0
    %51 = vmatprep.subr.mxu0 0.0
    %52 = vmatpush1.msra.mxu0 0.0
    %53 = vmatprep.subr.mxu0 0.0
    %54 = vmatpush1.msra.mxu0 0.0
    %55 = vmatprep.subr.mxu0 0.0
    %56 = vmatpush1.msra.mxu0 0.0
    %57 = vmatprep.subr.mxu0 0.0
    %58 = vmatpush1.msra.mxu0 0.0
    %59 = vmatprep.subr.mxu0 0.0
    %60 = vmatpush1.msra.mxu0 0.0
    %61 = vmatprep.subr.mxu0 0.0
    %62 = vmatpush1.msra.mxu0 0.0
    %63 = vmatprep.subr.mxu0 0.0
    %64 = vmatpush1.msra.mxu0 0.0
    %65 = vmatprep.subr.mxu0 0.0
    %66 = vmatpush1.msra.mxu0 0.0
    %67 = vmatprep.subr.mxu0 0.0
    %68 = vmatpush1.msra.mxu0 0.0
    %69 = vmatprep.subr.mxu0 0.0
    %70 = vmatpush1.msra.mxu0 0.0
    %71 = vmatprep.subr.mxu0 0.0
    %72 = vmatpush1.msra.mxu0 0.0
    %73 = vmatprep.subr.mxu0 0.0
    %74 = vmatpush1.msra.mxu0 0.0
    %75 = vmatprep.subr.mxu0 0.0
    %76 = vmatpush1.msra.mxu0 0.0
    %77 = vmatprep.subr.mxu0 0.0
    %78 = vmatpush1.msra.mxu0 0.0
    %79 = vmatprep.subr.mxu0 0.0
    %80 = vmatpush1.msra.mxu0 0.0
    %81 = vmatprep.subr.mxu0 0.0
    %82 = vmatpush1.msra.mxu0 0.0
    %83 = vmatprep.subr.mxu0 0.0
    %84 = vmatpush1.msra.mxu0 0.0
    %85 = vmatprep.subr.mxu0 0.0
    %86 = vmatpush1.msra.mxu0 0.0
    %87 = vmatprep.subr.mxu0 0.0
    %88 = vmatpush1.msra.mxu0 0.0
    %89 = vmatprep.subr.mxu0 0.0
    %90 = vmatpush1.msra.mxu0 0.0
    %91 = vmatprep.subr.mxu0 0.0
    %92 = vmatpush1.msra.mxu0 0.0
    %93 = vmatprep.subr.mxu0 0.0
    %94 = vmatpush1.msra.mxu0 0.0
    %95 = vmatprep.subr.mxu0 0.0
    %96 = vmatpush1.msra.mxu0 0.0
    %97 = vmatprep.subr.mxu0 0.0
    %98 = vmatpush1.msra.mxu0 0.0
    %99 = vmatprep.subr.mxu0 0.0
    %100 = vmatpush1.msra.mxu0 0.0
    %101 = vmatprep.subr.mxu0 0.0
    %102 = vmatpush1.msra.mxu0 0.0
    %103 = vmatprep.mubr.f32.mxu0 0.0
    %v104 = vand.u32 %v33, 4294901760
    %v105 = vsub.f32 %v33, %v104
    %v106 = vand.u32 %v105, 4294901760
    %v107 = vsub.f32 %v105, %v106
    %v108 = vand.u32 %v107, 4294901760
    %109 = vmatmul.mubr.f32.gmra.mrb[0].mxu0 %v108
    %v110 = vpop.f32.mrb[0].mxu0
    %v111 = vadd.f32 %v30, %v110
    %v112 = vpop.f32.mrb[0].mxu0
    %113 = vdwg.mxu0
    %114 = vmatprep.subr.mxu0 0.0
    %v115 = vand.u32 %v22, 4294901760
    %v116 = vsub.f32 %v22, %v115
    %v117 = vand.u32 %v116, 4294901760
    %v118 = vsub.f32 %v116, %v117
    %v119 = vand.u32 %v118, 4294901760
    %120 = vmatpush1.msra.mxu0 %v119
    %121 = vmatprep.subr.mxu0 0.0
    %v122 = vand.u32 %v23, 4294901760
    %v123 = vsub.f32 %v23, %v122
    %v124 = vand.u32 %v123, 4294901760
    %v125 = vsub.f32 %v123, %v124
    %v126 = vand.u32 %v125, 4294901760
    %127 = vmatpush1.msra.mxu0 %v126
    %128 = vmatprep.subr.mxu0 0.0
    %v129 = vand.u32 %v24, 4294901760
    %v130 = vsub.f32 %v24, %v129
    %v131 = vand.u32 %v130, 4294901760
    %v132 = vsub.f32 %v130, %v131
    %v133 = vand.u32 %v132, 4294901760
    %134 = vmatpush1.msra.mxu0 %v133
    %135 = vmatprep.subr.mxu0 0.0
    %v136 = vand.u32 %v25, 4294901760
    %v137 = vsub.f32 %v25, %v136
    %v138 = vand.u32 %v137, 4294901760
    %v139 = vsub.f32 %v137, %v138
    %v140 = vand.u32 %v139, 4294901760
    %141 = vmatpush1.msra.mxu0 %v140
    %142 = vmatprep.subr.mxu0 0.0
    %143 = vmatpush1.msra.mxu0 0.0
    %144 = vmatprep.subr.mxu0 0.0
    %145 = vmatpush1.msra.mxu0 0.0
    %146 = vmatprep.subr.mxu0 0.0
    %147 = vmatpush1.msra.mxu0 0.0
    %148 = vmatprep.subr.mxu0 0.0
    %149 = vmatpush1.msra.mxu0 0.0
    %150 = vmatprep.subr.mxu0 0.0
    %151 = vmatpush1.msra.mxu0 0.0
    %152 = vmatprep.subr.mxu0 0.0
    %153 = vmatpush1.msra.mxu0 0.0
    %154 = vmatprep.subr.mxu0 0.0
    %155 = vmatpush1.msra.mxu0 0.0
    %156 = vmatprep.subr.mxu0 0.0
    %157 = vmatpush1.msra.mxu0 0.0
    %158 = vmatprep.subr.mxu0 0.0
    %159 = vmatpush1.msra.mxu0 0.0
    %160 = vmatprep.subr.mxu0 0.0
    %161 = vmatpush1.msra.mxu0 0.0
    %162 = vmatprep.subr.mxu0 0.0
    %163 = vmatpush1.msra.mxu0 0.0
    %164 = vmatprep.subr.mxu0 0.0
    %165 = vmatpush1.msra.mxu0 0.0
    %166 = vmatprep.subr.mxu0 0.0
    %167 = vmatpush1.msra.mxu0 0.0
    %168 = vmatprep.subr.mxu0 0.0
    %169 = vmatpush1.msra.mxu0 0.0
    %170 = vmatprep.subr.mxu0 0.0
    %171 = vmatpush1.msra.mxu0 0.0
    %172 = vmatprep.subr.mxu0 0.0
    %173 = vmatpush1.msra.mxu0 0.0
    %174 = vmatprep.subr.mxu0 0.0
    %175 = vmatpush1.msra.mxu0 0.0
    %176 = vmatprep.subr.mxu0 0.0
    %177 = vmatpush1.msra.mxu0 0.0
    %178 = vmatprep.subr.mxu0 0.0
    %179 = vmatpush1.msra.mxu0 0.0
    %180 = vmatprep.subr.mxu0 0.0
    %181 = vmatpush1.msra.mxu0 0.0
    %182 = vmatprep.subr.mxu0 0.0
    %183 = vmatpush1.msra.mxu0 0.0
    %184 = vmatprep.subr.mxu0 0.0
    %185 = vmatpush1.msra.mxu0 0.0
    %186 = vmatprep.subr.mxu0 0.0
    %187 = vmatpush1.msra.mxu0 0.0
    %188 = vmatprep.subr.mxu0 0.0
    %189 = vmatpush1.msra.mxu0 0.0
    %190 = vmatprep.subr.mxu0 0.0
    %191 = vmatpush1.msra.mxu0 0.0
    %192 = vmatprep.subr.mxu0 0.0
    %193 = vmatpush1.msra.mxu0 0.0
    %194 = vmatprep.subr.mxu0 0.0
    %195 = vmatpush1.msra.mxu0 0.0
    %196 = vmatprep.subr.mxu0 0.0
    %197 = vmatpush1.msra.mxu0 0.0
    %198 = vmatprep.mubr.f32.mxu0 0.0
    %v199 = vand.u32 %v33, 4294901760
    %200 = vmatmul.mubr.f32.gmra.mrb[0].mxu0 %v199
    %v201 = vpop.f32.mrb[0].mxu0
    %v202 = vadd.f32 %v111, %v201
    %v203 = vpop.f32.mrb[0].mxu0
    %204 = vdwg.mxu0
    %205 = vmatprep.subr.mxu0 0.0
    %v206 = vand.u32 %v22, 4294901760
    %v207 = vsub.f32 %v22, %v206
    %208 = vmatpush1.msra.mxu0 %v207
    %209 = vmatprep.subr.mxu0 0.0
    %v210 = vand.u32 %v23, 4294901760
    %v211 = vsub.f32 %v23, %v210
    %212 = vmatpush1.msra.mxu0 %v211
    %213 = vmatprep.subr.mxu0 0.0
    %v214 = vand.u32 %v24, 4294901760
    %v215 = vsub.f32 %v24, %v214
    %216 = vmatpush1.msra.mxu0 %v215
    %217 = vmatprep.subr.mxu0 0.0
    %v218 = vand.u32 %v25, 4294901760
    %v219 = vsub.f32 %v25, %v218
    %220 = vmatpush1.msra.mxu0 %v219
    %221 = vmatprep.subr.mxu0 0.0
    %222 = vmatpush1.msra.mxu0 0.0
    %223 = vmatprep.subr.mxu0 0.0
    %224 = vmatpush1.msra.mxu0 0.0
    %225 = vmatprep.subr.mxu0 0.0
    %226 = vmatpush1.msra.mxu0 0.0
    %227 = vmatprep.subr.mxu0 0.0
    %228 = vmatpush1.msra.mxu0 0.0
    %229 = vmatprep.subr.mxu0 0.0
    %230 = vmatpush1.msra.mxu0 0.0
    %231 = vmatprep.subr.mxu0 0.0
    %232 = vmatpush1.msra.mxu0 0.0
    %233 = vmatprep.subr.mxu0 0.0
    %234 = vmatpush1.msra.mxu0 0.0
    %235 = vmatprep.subr.mxu0 0.0
    %236 = vmatpush1.msra.mxu0 0.0
    %237 = vmatprep.subr.mxu0 0.0
    %238 = vmatpush1.msra.mxu0 0.0
    %239 = vmatprep.subr.mxu0 0.0
    %240 = vmatpush1.msra.mxu0 0.0
    %241 = vmatprep.subr.mxu0 0.0
    %242 = vmatpush1.msra.mxu0 0.0
    %243 = vmatprep.subr.mxu0 0.0
    %244 = vmatpush1.msra.mxu0 0.0
    %245 = vmatprep.subr.mxu0 0.0
    %246 = vmatpush1.msra.mxu0 0.0
    %247 = vmatprep.subr.mxu0 0.0
    %248 = vmatpush1.msra.mxu0 0.0
    %249 = vmatprep.subr.mxu0 0.0
    %250 = vmatpush1.msra.mxu0 0.0
    %251 = vmatprep.subr.mxu0 0.0
    %252 = vmatpush1.msra.mxu0 0.0
    %253 = vmatprep.subr.mxu0 0.0
    %254 = vmatpush1.msra.mxu0 0.0
    %255 = vmatprep.subr.mxu0 0.0
    %256 = vmatpush1.msra.mxu0 0.0
    %257 = vmatprep.subr.mxu0 0.0
    %258 = vmatpush1.msra.mxu0 0.0
    %259 = vmatprep.subr.mxu0 0.0
    %260 = vmatpush1.msra.mxu0 0.0
    %261 = vmatprep.subr.mxu0 0.0
    %262 = vmatpush1.msra.mxu0 0.0
    %263 = vmatprep.subr.mxu0 0.0
    %264 = vmatpush1.msra.mxu0 0.0
    %265 = vmatprep.subr.mxu0 0.0
    %266 = vmatpush1.msra.mxu0 0.0
    %267 = vmatprep.subr.mxu0 0.0
    %268 = vmatpush1.msra.mxu0 0.0
    %269 = vmatprep.subr.mxu0 0.0
    %270 = vmatpush1.msra.mxu0 0.0
    %271 = vmatprep.subr.mxu0 0.0
    %272 = vmatpush1.msra.mxu0 0.0
    %273 = vmatprep.subr.mxu0 0.0
    %274 = vmatpush1.msra.mxu0 0.0
    %275 = vmatprep.subr.mxu0 0.0
    %276 = vmatpush1.msra.mxu0 0.0
    %277 = vmatprep.mubr.f32.mxu0 0.0
    %v278 = vand.u32 %v33, 4294901760
    %v279 = vsub.f32 %v33, %v278
    %280 = vmatmul.mubr.f32.gmra.mrb[0].mxu0 %v279
    %v281 = vpop.f32.mrb[0].mxu0
    %v282 = vadd.f32 %v202, %v281
    %v283 = vpop.f32.mrb[0].mxu0
    %284 = vdwg.mxu0
    %285 = vmatprep.subr.mxu0 0.0
    %v286 = vand.u32 %v22, 4294901760
    %287 = vmatpush1.msra.mxu0 %v286
    %288 = vmatprep.subr.mxu0 0.0
    %v289 = vand.u32 %v23, 4294901760
    %290 = vmatpush1.msra.mxu0 %v289
    %291 = vmatprep.subr.mxu0 0.0
    %v292 = vand.u32 %v24, 4294901760
    %293 = vmatpush1.msra.mxu0 %v292
    %294 = vmatprep.subr.mxu0 0.0
    %v295 = vand.u32 %v25, 4294901760
    %296 = vmatpush1.msra.mxu0 %v295
    %297 = vmatprep.subr.mxu0 0.0
    %298 = vmatpush1.msra.mxu0 0.0
    %299 = vmatprep.subr.mxu0 0.0
    %300 = vmatpush1.msra.mxu0 0.0
    %301 = vmatprep.subr.mxu0 0.0
    %302 = vmatpush1.msra.mxu0 0.0
    %303 = vmatprep.subr.mxu0 0.0
    %304 = vmatpush1.msra.mxu0 0.0
    %305 = vmatprep.subr.mxu0 0.0
    %306 = vmatpush1.msra.mxu0 0.0
    %307 = vmatprep.subr.mxu0 0.0
    %308 = vmatpush1.msra.mxu0 0.0
    %309 = vmatprep.subr.mxu0 0.0
    %310 = vmatpush1.msra.mxu0 0.0
    %311 = vmatprep.subr.mxu0 0.0
    %312 = vmatpush1.msra.mxu0 0.0
    %313 = vmatprep.subr.mxu0 0.0
    %314 = vmatpush1.msra.mxu0 0.0
    %315 = vmatprep.subr.mxu0 0.0
    %316 = vmatpush1.msra.mxu0 0.0
    %317 = vmatprep.subr.mxu0 0.0
    %318 = vmatpush1.msra.mxu0 0.0
    %319 = vmatprep.subr.mxu0 0.0
    %320 = vmatpush1.msra.mxu0 0.0
    %321 = vmatprep.subr.mxu0 0.0
    %322 = vmatpush1.msra.mxu0 0.0
    %323 = vmatprep.subr.mxu0 0.0
    %324 = vmatpush1.msra.mxu0 0.0
    %325 = vmatprep.subr.mxu0 0.0
    %326 = vmatpush1.msra.mxu0 0.0
    %327 = vmatprep.subr.mxu0 0.0
    %328 = vmatpush1.msra.mxu0 0.0
    %329 = vmatprep.subr.mxu0 0.0
    %330 = vmatpush1.msra.mxu0 0.0
    %331 = vmatprep.subr.mxu0 0.0
    %332 = vmatpush1.msra.mxu0 0.0
    %333 = vmatprep.subr.mxu0 0.0
    %334 = vmatpush1.msra.mxu0 0.0
    %335 = vmatprep.subr.mxu0 0.0
    %336 = vmatpush1.msra.mxu0 0.0
    %337 = vmatprep.subr.mxu0 0.0
    %338 = vmatpush1.msra.mxu0 0.0
    %339 = vmatprep.subr.mxu0 0.0
    %340 = vmatpush1.msra.mxu0 0.0
    %341 = vmatprep.subr.mxu0 0.0
    %342 = vmatpush1.msra.mxu0 0.0
    %343 = vmatprep.subr.mxu0 0.0
    %344 = vmatpush1.msra.mxu0 0.0
    %345 = vmatprep.subr.mxu0 0.0
    %346 = vmatpush1.msra.mxu0 0.0
    %347 = vmatprep.subr.mxu0 0.0
    %348 = vmatpush1.msra.mxu0 0.0
    %349 = vmatprep.subr.mxu0 0.0
    %350 = vmatpush1.msra.mxu0 0.0
    %351 = vmatprep.subr.mxu0 0.0
    %352 = vmatpush1.msra.mxu0 0.0
    %353 = vmatprep.mubr.f32.mxu0 0.0
    %v354 = vand.u32 %v33, 4294901760
    %v355 = vsub.f32 %v33, %v354
    %v356 = vand.u32 %v355, 4294901760
    %357 = vmatmul.mubr.f32.gmra.mrb[0].mxu0 %v356
    %v358 = vpop.f32.mrb[0].mxu0
    %v359 = vadd.f32 %v282, %v358
    %v360 = vpop.f32.mrb[0].mxu0
    %361 = vdwg.mxu0
    %362 = vmatprep.subr.mxu0 0.0
    %v363 = vand.u32 %v22, 4294901760
    %v364 = vsub.f32 %v22, %v363
    %v365 = vand.u32 %v364, 4294901760
    %366 = vmatpush1.msra.mxu0 %v365
    %367 = vmatprep.subr.mxu0 0.0
    %v368 = vand.u32 %v23, 4294901760
    %v369 = vsub.f32 %v23, %v368
    %v370 = vand.u32 %v369, 4294901760
    %371 = vmatpush1.msra.mxu0 %v370
    %372 = vmatprep.subr.mxu0 0.0
    %v373 = vand.u32 %v24, 4294901760
    %v374 = vsub.f32 %v24, %v373
    %v375 = vand.u32 %v374, 4294901760
    %376 = vmatpush1.msra.mxu0 %v375
    %377 = vmatprep.subr.mxu0 0.0
    %v378 = vand.u32 %v25, 4294901760
    %v379 = vsub.f32 %v25, %v378
    %v380 = vand.u32 %v379, 4294901760
    %381 = vmatpush1.msra.mxu0 %v380
    %382 = vmatprep.subr.mxu0 0.0
    %383 = vmatpush1.msra.mxu0 0.0
    %384 = vmatprep.subr.mxu0 0.0
    %385 = vmatpush1.msra.mxu0 0.0
    %386 = vmatprep.subr.mxu0 0.0
    %387 = vmatpush1.msra.mxu0 0.0
    %388 = vmatprep.subr.mxu0 0.0
    %389 = vmatpush1.msra.mxu0 0.0
    %390 = vmatprep.subr.mxu0 0.0
    %391 = vmatpush1.msra.mxu0 0.0
    %392 = vmatprep.subr.mxu0 0.0
    %393 = vmatpush1.msra.mxu0 0.0
    %394 = vmatprep.subr.mxu0 0.0
    %395 = vmatpush1.msra.mxu0 0.0
    %396 = vmatprep.subr.mxu0 0.0
    %397 = vmatpush1.msra.mxu0 0.0
    %398 = vmatprep.subr.mxu0 0.0
    %399 = vmatpush1.msra.mxu0 0.0
    %400 = vmatprep.subr.mxu0 0.0
    %401 = vmatpush1.msra.mxu0 0.0
    %402 = vmatprep.subr.mxu0 0.0
    %403 = vmatpush1.msra.mxu0 0.0
    %404 = vmatprep.subr.mxu0 0.0
    %405 = vmatpush1.msra.mxu0 0.0
    %406 = vmatprep.subr.mxu0 0.0
    %407 = vmatpush1.msra.mxu0 0.0
    %408 = vmatprep.subr.mxu0 0.0
    %409 = vmatpush1.msra.mxu0 0.0
    %410 = vmatprep.subr.mxu0 0.0
    %411 = vmatpush1.msra.mxu0 0.0
    %412 = vmatprep.subr.mxu0 0.0
    %413 = vmatpush1.msra.mxu0 0.0
    %414 = vmatprep.subr.mxu0 0.0
    %415 = vmatpush1.msra.mxu0 0.0
    %416 = vmatprep.subr.mxu0 0.0
    %417 = vmatpush1.msra.mxu0 0.0
    %418 = vmatprep.subr.mxu0 0.0
    %419 = vmatpush1.msra.mxu0 0.0
    %420 = vmatprep.subr.mxu0 0.0
    %421 = vmatpush1.msra.mxu0 0.0
    %422 = vmatprep.subr.mxu0 0.0
    %423 = vmatpush1.msra.mxu0 0.0
    %424 = vmatprep.subr.mxu0 0.0
    %425 = vmatpush1.msra.mxu0 0.0
    %426 = vmatprep.subr.mxu0 0.0
    %427 = vmatpush1.msra.mxu0 0.0
    %428 = vmatprep.subr.mxu0 0.0
    %429 = vmatpush1.msra.mxu0 0.0
    %430 = vmatprep.subr.mxu0 0.0
    %431 = vmatpush1.msra.mxu0 0.0
    %432 = vmatprep.subr.mxu0 0.0
    %433 = vmatpush1.msra.mxu0 0.0
    %434 = vmatprep.subr.mxu0 0.0
    %435 = vmatpush1.msra.mxu0 0.0
    %436 = vmatprep.subr.mxu0 0.0
    %437 = vmatpush1.msra.mxu0 0.0
    %438 = vmatprep.mubr.f32.mxu0 0.0
    %v439 = vand.u32 %v33, 4294901760
    %440 = vmatmul.mubr.f32.gmra.mrb[0].mxu0 %v439
    %v441 = vpop.f32.mrb[0].mxu0
    %v442 = vadd.f32 %v359, %v441
    %v443 = vpop.f32.mrb[0].mxu0
    %444 = vdwg.mxu0
    %445 = vmatprep.subr.mxu0 0.0
    %v446 = vand.u32 %v22, 4294901760
    %447 = vmatpush1.msra.mxu0 %v446
    %448 = vmatprep.subr.mxu0 0.0
    %v449 = vand.u32 %v23, 4294901760
    %450 = vmatpush1.msra.mxu0 %v449
    %451 = vmatprep.subr.mxu0 0.0
    %v452 = vand.u32 %v24, 4294901760
    %453 = vmatpush1.msra.mxu0 %v452
    %454 = vmatprep.subr.mxu0 0.0
    %v455 = vand.u32 %v25, 4294901760
    %456 = vmatpush1.msra.mxu0 %v455
    %457 = vmatprep.subr.mxu0 0.0
    %458 = vmatpush1.msra.mxu0 0.0
    %459 = vmatprep.subr.mxu0 0.0
    %460 = vmatpush1.msra.mxu0 0.0
    %461 = vmatprep.subr.mxu0 0.0
    %462 = vmatpush1.msra.mxu0 0.0
    %463 = vmatprep.subr.mxu0 0.0
    %464 = vmatpush1.msra.mxu0 0.0
    %465 = vmatprep.subr.mxu0 0.0
    %466 = vmatpush1.msra.mxu0 0.0
    %467 = vmatprep.subr.mxu0 0.0
    %468 = vmatpush1.msra.mxu0 0.0
    %469 = vmatprep.subr.mxu0 0.0
    %470 = vmatpush1.msra.mxu0 0.0
    %471 = vmatprep.subr.mxu0 0.0
    %472 = vmatpush1.msra.mxu0 0.0
    %473 = vmatprep.subr.mxu0 0.0
    %474 = vmatpush1.msra.mxu0 0.0
    %475 = vmatprep.subr.mxu0 0.0
    %476 = vmatpush1.msra.mxu0 0.0
    %477 = vmatprep.subr.mxu0 0.0
    %478 = vmatpush1.msra.mxu0 0.0
    %479 = vmatprep.subr.mxu0 0.0
    %480 = vmatpush1.msra.mxu0 0.0
    %481 = vmatprep.subr.mxu0 0.0
    %482 = vmatpush1.msra.mxu0 0.0
    %483 = vmatprep.subr.mxu0 0.0
    %484 = vmatpush1.msra.mxu0 0.0
    %485 = vmatprep.subr.mxu0 0.0
    %486 = vmatpush1.msra.mxu0 0.0
    %487 = vmatprep.subr.mxu0 0.0
    %488 = vmatpush1.msra.mxu0 0.0
    %489 = vmatprep.subr.mxu0 0.0
    %490 = vmatpush1.msra.mxu0 0.0
    %491 = vmatprep.subr.mxu0 0.0
    %492 = vmatpush1.msra.mxu0 0.0
    %493 = vmatprep.subr.mxu0 0.0
    %494 = vmatpush1.msra.mxu0 0.0
    %495 = vmatprep.subr.mxu0 0.0
    %496 = vmatpush1.msra.mxu0 0.0
    %497 = vmatprep.subr.mxu0 0.0
    %498 = vmatpush1.msra.mxu0 0.0
    %499 = vmatprep.subr.mxu0 0.0
    %500 = vmatpush1.msra.mxu0 0.0
    %501 = vmatprep.subr.mxu0 0.0
    %502 = vmatpush1.msra.mxu0 0.0
    %503 = vmatprep.subr.mxu0 0.0
    %504 = vmatpush1.msra.mxu0 0.0
    %505 = vmatprep.subr.mxu0 0.0
    %506 = vmatpush1.msra.mxu0 0.0
    %507 = vmatprep.subr.mxu0 0.0
    %508 = vmatpush1.msra.mxu0 0.0
    %509 = vmatprep.subr.mxu0 0.0
    %510 = vmatpush1.msra.mxu0 0.0
    %511 = vmatprep.subr.mxu0 0.0
    %512 = vmatpush1.msra.mxu0 0.0
    %513 = vmatprep.mubr.f32.mxu0 0.0
    %v514 = vand.u32 %v33, 4294901760
    %515 = vmatmul.mubr.f32.gmra.mrb[0].mxu0 %v514
    %v516 = vpop.f32.mrb[0].mxu0
    %v517 = vadd.f32 %v442, %v516
    %v518 = vpop.f32.mrb[0].mxu0
    %519 = vdwg.mxu0
    %v520 = vxor.u32 %v517, 2147483648
    %v521 = vmul.f32 %v520, 1.442695
    %v522 = vpow.pop %v521
    %v523 = vadd.f32 %v522, 1.0
    %v524 = vrcp.pop %v523
    %v525 = vmul.f32 1.0, %v524
    %v526 = vmul.f32 %v517, %v525
    %v527 = vld [vmem:[%s2 + $0x1] sm:$0x1]
    %v528 = vlaneseq
    %v529 = vshrl.u32 %v528, 7
    %v530 = vsub.s32 0, %v529
    %v531 = vrot.slane %v527, %v530
    %v532 = vadd.f32 %v526, %v531
    %v533 = vld [vmem:[%s3] sm:$0xff]
    %v534 = vld [vmem:[%s3 + $0x8] sm:$0xff]
    %v535 = vld [vmem:[%s3 + $0x10] sm:$0xff]
    %v536 = vld [vmem:[%s3 + $0x18] sm:$0xff]
    %v537 = vld [vmem:[%s3 + $0x20] sm:$0xff]
    %v538 = vld [vmem:[%s3 + $0x28] sm:$0xff]
    %v539 = vld [vmem:[%s3 + $0x30] sm:$0xff]
    %v540 = vld [vmem:[%s3 + $0x38] sm:$0xff]
    %v541 = vld [vmem:[%s4] sm:$0x1]
    %v542 = vlaneseq
    %v543 = vshrl.u32 %v542, 7
    %v544 = vsub.s32 0, %v543
    %v545 = vrot.slane %v541, %v544
    %vm546 = vcmask 523264
    %v548 = vsel %vm546, %v532, 0
    %550 = vmatprep.subr.mxu0 0.0
    %v551 = vand.u32 %v533, 4294901760
    %552 = vmatpush1.msra.mxu0 %v551
    %553 = vmatprep.subr.mxu0 0.0
    %v554 = vand.u32 %v534, 4294901760
    %555 = vmatpush1.msra.mxu0 %v554
    %556 = vmatprep.subr.mxu0 0.0
    %v557 = vand.u32 %v535, 4294901760
    %558 = vmatpush1.msra.mxu0 %v557
    %559 = vmatprep.subr.mxu0 0.0
    %v560 = vand.u32 %v536, 4294901760
    %561 = vmatpush1.msra.mxu0 %v560
    %562 = vmatprep.subr.mxu0 0.0
    %v563 = vand.u32 %v537, 4294901760
    %564 = vmatpush1.msra.mxu0 %v563
    %565 = vmatprep.subr.mxu0 0.0
    %v566 = vand.u32 %v538, 4294901760
    %567 = vmatpush1.msra.mxu0 %v566
    %568 = vmatprep.subr.mxu0 0.0
    %v569 = vand.u32 %v539, 4294901760
    %570 = vmatpush1.msra.mxu0 %v569
    %571 = vmatprep.subr.mxu0 0.0
    %v572 = vand.u32 %v540, 4294901760
    %573 = vmatpush1.msra.mxu0 %v572
    %574 = vmatprep.subr.mxu0 0.0
    %575 = vmatpush1.msra.mxu0 0.0
    %576 = vmatprep.subr.mxu0 0.0
    %577 = vmatpush1.msra.mxu0 0.0
    %578 = vmatprep.subr.mxu0 0.0
    %579 = vmatpush1.msra.mxu0 0.0
    %580 = vmatprep.subr.mxu0 0.0
    %581 = vmatpush1.msra.mxu0 0.0
    %582 = vmatprep.subr.mxu0 0.0
    %583 = vmatpush1.msra.mxu0 0.0
    %584 = vmatprep.subr.mxu0 0.0
    %585 = vmatpush1.msra.mxu0 0.0
    %586 = vmatprep.subr.mxu0 0.0
    %587 = vmatpush1.msra.mxu0 0.0
    %588 = vmatprep.subr.mxu0 0.0
    %589 = vmatpush1.msra.mxu0 0.0
    %590 = vmatprep.subr.mxu0 0.0
    %591 = vmatpush1.msra.mxu0 0.0
    %592 = vmatprep.subr.mxu0 0.0
    %593 = vmatpush1.msra.mxu0 0.0
    %594 = vmatprep.subr.mxu0 0.0
    %595 = vmatpush1.msra.mxu0 0.0
    %596 = vmatprep.subr.mxu0 0.0
    %597 = vmatpush1.msra.mxu0 0.0
    %598 = vmatprep.subr.mxu0 0.0
    %599 = vmatpush1.msra.mxu0 0.0
    %600 = vmatprep.subr.mxu0 0.0
    %601 = vmatpush1.msra.mxu0 0.0
    %602 = vmatprep.subr.mxu0 0.0
    %603 = vmatpush1.msra.mxu0 0.0
    %604 = vmatprep.subr.mxu0 0.0
    %605 = vmatpush1.msra.mxu0 0.0
    %606 = vmatprep.subr.mxu0 0.0
    %607 = vmatpush1.msra.mxu0 0.0
    %608 = vmatprep.subr.mxu0 0.0
    %609 = vmatpush1.msra.mxu0 0.0
    %610 = vmatprep.subr.mxu0 0.0
    %611 = vmatpush1.msra.mxu0 0.0
    %612 = vmatprep.subr.mxu0 0.0
    %613 = vmatpush1.msra.mxu0 0.0
    %614 = vmatprep.subr.mxu0 0.0
    %615 = vmatpush1.msra.mxu0 0.0
    %616 = vmatprep.subr.mxu0 0.0
    %617 = vmatpush1.msra.mxu0 0.0
    %618 = vmatprep.subr.mxu0 0.0
    %619 = vmatpush1.msra.mxu0 0.0
    %620 = vmatprep.subr.mxu0 0.0
    %621 = vmatpush1.msra.mxu0 0.0
    %622 = vmatprep.mubr.f32.mxu0 0.0
    %v623 = vand.u32 %v548, 4294901760
    %v624 = vsub.f32 %v548, %v623
    %v625 = vand.u32 %v624, 4294901760
    %v626 = vsub.f32 %v624, %v625
    %v627 = vand.u32 %v626, 4294901760
    %628 = vmatmul.mubr.f32.gmra.mrb[0].mxu0 %v627
    %v629 = vpop.f32.mrb[0].mxu0
    %v630 = vadd.f32 %v545, %v629
    %v631 = vpop.f32.mrb[0].mxu0
    %632 = vdwg.mxu0
    %633 = vmatprep.subr.mxu0 0.0
    %v634 = vand.u32 %v533, 4294901760
    %v635 = vsub.f32 %v533, %v634
    %v636 = vand.u32 %v635, 4294901760
    %v637 = vsub.f32 %v635, %v636
    %v638 = vand.u32 %v637, 4294901760
    %639 = vmatpush1.msra.mxu0 %v638
    %640 = vmatprep.subr.mxu0 0.0
    %v641 = vand.u32 %v534, 4294901760
    %v642 = vsub.f32 %v534, %v641
    %v643 = vand.u32 %v642, 4294901760
    %v644 = vsub.f32 %v642, %v643
    %v645 = vand.u32 %v644, 4294901760
    %646 = vmatpush1.msra.mxu0 %v645
    %647 = vmatprep.subr.mxu0 0.0
    %v648 = vand.u32 %v535, 4294901760
    %v649 = vsub.f32 %v535, %v648
    %v650 = vand.u32 %v649, 4294901760
    %v651 = vsub.f32 %v649, %v650
    %v652 = vand.u32 %v651, 4294901760
    %653 = vmatpush1.msra.mxu0 %v652
    %654 = vmatprep.subr.mxu0 0.0
    %v655 = vand.u32 %v536, 4294901760
    %v656 = vsub.f32 %v536, %v655
    %v657 = vand.u32 %v656, 4294901760
    %v658 = vsub.f32 %v656, %v657
    %v659 = vand.u32 %v658, 4294901760
    %660 = vmatpush1.msra.mxu0 %v659
    %661 = vmatprep.subr.mxu0 0.0
    %v662 = vand.u32 %v537, 4294901760
    %v663 = vsub.f32 %v537, %v662
    %v664 = vand.u32 %v663, 4294901760
    %v665 = vsub.f32 %v663, %v664
    %v666 = vand.u32 %v665, 4294901760
    %667 = vmatpush1.msra.mxu0 %v666
    %668 = vmatprep.subr.mxu0 0.0
    %v669 = vand.u32 %v538, 4294901760
    %v670 = vsub.f32 %v538, %v669
    %v671 = vand.u32 %v670, 4294901760
    %v672 = vsub.f32 %v670, %v671
    %v673 = vand.u32 %v672, 4294901760
    %674 = vmatpush1.msra.mxu0 %v673
    %675 = vmatprep.subr.mxu0 0.0
    %v676 = vand.u32 %v539, 4294901760
    %v677 = vsub.f32 %v539, %v676
    %v678 = vand.u32 %v677, 4294901760
    %v679 = vsub.f32 %v677, %v678
    %v680 = vand.u32 %v679, 4294901760
    %681 = vmatpush1.msra.mxu0 %v680
    %682 = vmatprep.subr.mxu0 0.0
    %v683 = vand.u32 %v540, 4294901760
    %v684 = vsub.f32 %v540, %v683
    %v685 = vand.u32 %v684, 4294901760
    %v686 = vsub.f32 %v684, %v685
    %v687 = vand.u32 %v686, 4294901760
    %688 = vmatpush1.msra.mxu0 %v687
    %689 = vmatprep.subr.mxu0 0.0
    %690 = vmatpush1.msra.mxu0 0.0
    %691 = vmatprep.subr.mxu0 0.0
    %692 = vmatpush1.msra.mxu0 0.0
    %693 = vmatprep.subr.mxu0 0.0
    %694 = vmatpush1.msra.mxu0 0.0
    %695 = vmatprep.subr.mxu0 0.0
    %696 = vmatpush1.msra.mxu0 0.0
    %697 = vmatprep.subr.mxu0 0.0
    %698 = vmatpush1.msra.mxu0 0.0
    %699 = vmatprep.subr.mxu0 0.0
    %700 = vmatpush1.msra.mxu0 0.0
    %701 = vmatprep.subr.mxu0 0.0
    %702 = vmatpush1.msra.mxu0 0.0
    %703 = vmatprep.subr.mxu0 0.0
    %704 = vmatpush1.msra.mxu0 0.0
    %705 = vmatprep.subr.mxu0 0.0
    %706 = vmatpush1.msra.mxu0 0.0
    %707 = vmatprep.subr.mxu0 0.0
    %708 = vmatpush1.msra.mxu0 0.0
    %709 = vmatprep.subr.mxu0 0.0
    %710 = vmatpush1.msra.mxu0 0.0
    %711 = vmatprep.subr.mxu0 0.0
    %712 = vmatpush1.msra.mxu0 0.0
    %713 = vmatprep.subr.mxu0 0.0
    %714 = vmatpush1.msra.mxu0 0.0
    %715 = vmatprep.subr.mxu0 0.0
    %716 = vmatpush1.msra.mxu0 0.0
    %717 = vmatprep.subr.mxu0 0.0
    %718 = vmatpush1.msra.mxu0 0.0
    %719 = vmatprep.subr.mxu0 0.0
    %720 = vmatpush1.msra.mxu0 0.0
    %721 = vmatprep.subr.mxu0 0.0
    %722 = vmatpush1.msra.mxu0 0.0
    %723 = vmatprep.subr.mxu0 0.0
    %724 = vmatpush1.msra.mxu0 0.0
    %725 = vmatprep.subr.mxu0 0.0
    %726 = vmatpush1.msra.mxu0 0.0
    %727 = vmatprep.subr.mxu0 0.0
    %728 = vmatpush1.msra.mxu0 0.0
    %729 = vmatprep.subr.mxu0 0.0
    %730 = vmatpush1.msra.mxu0 0.0
    %731 = vmatprep.subr.mxu0 0.0
    %732 = vmatpush1.msra.mxu0 0.0
    %733 = vmatprep.subr.mxu0 0.0
    %734 = vmatpush1.msra.mxu0 0.0
    %735 = vmatprep.subr.mxu0 0.0
    %736 = vmatpush1.msra.mxu0 0.0
    %737 = vmatprep.mubr.f32.mxu0 0.0
    %v738 = vand.u32 %v548, 4294901760
    %739 = vmatmul.mubr.f32.gmra.mrb[0].mxu0 %v738
    %v740 = vpop.f32.mrb[0].mxu0
    %v741 = vadd.f32 %v630, %v740
    %v742 = vpop.f32.mrb[0].mxu0
    %743 = vdwg.mxu0
    %744 = vmatprep.subr.mxu0 0.0
    %v745 = vand.u32 %v533, 4294901760
    %v746 = vsub.f32 %v533, %v745
    %747 = vmatpush1.msra.mxu0 %v746
    %748 = vmatprep.subr.mxu0 0.0
    %v749 = vand.u32 %v534, 4294901760
    %v750 = vsub.f32 %v534, %v749
    %751 = vmatpush1.msra.mxu0 %v750
    %752 = vmatprep.subr.mxu0 0.0
    %v753 = vand.u32 %v535, 4294901760
    %v754 = vsub.f32 %v535, %v753
    %755 = vmatpush1.msra.mxu0 %v754
    %756 = vmatprep.subr.mxu0 0.0
    %v757 = vand.u32 %v536, 4294901760
    %v758 = vsub.f32 %v536, %v757
    %759 = vmatpush1.msra.mxu0 %v758
    %760 = vmatprep.subr.mxu0 0.0
    %v761 = vand.u32 %v537, 4294901760
    %v762 = vsub.f32 %v537, %v761
    %763 = vmatpush1.msra.mxu0 %v762
    %764 = vmatprep.subr.mxu0 0.0
    %v765 = vand.u32 %v538, 4294901760
    %v766 = vsub.f32 %v538, %v765
    %767 = vmatpush1.msra.mxu0 %v766
    %768 = vmatprep.subr.mxu0 0.0
    %v769 = vand.u32 %v539, 4294901760
    %v770 = vsub.f32 %v539, %v769
    %771 = vmatpush1.msra.mxu0 %v770
    %772 = vmatprep.subr.mxu0 0.0
    %v773 = vand.u32 %v540, 4294901760
    %v774 = vsub.f32 %v540, %v773
    %775 = vmatpush1.msra.mxu0 %v774
    %776 = vmatprep.subr.mxu0 0.0
    %777 = vmatpush1.msra.mxu0 0.0
    %778 = vmatprep.subr.mxu0 0.0
    %779 = vmatpush1.msra.mxu0 0.0
    %780 = vmatprep.subr.mxu0 0.0
    %781 = vmatpush1.msra.mxu0 0.0
    %782 = vmatprep.subr.mxu0 0.0
    %783 = vmatpush1.msra.mxu0 0.0
    %784 = vmatprep.subr.mxu0 0.0
    %785 = vmatpush1.msra.mxu0 0.0
    %786 = vmatprep.subr.mxu0 0.0
    %787 = vmatpush1.msra.mxu0 0.0
    %788 = vmatprep.subr.mxu0 0.0
    %789 = vmatpush1.msra.mxu0 0.0
    %790 = vmatprep.subr.mxu0 0.0
    %791 = vmatpush1.msra.mxu0 0.0
    %792 = vmatprep.subr.mxu0 0.0
    %793 = vmatpush1.msra.mxu0 0.0
    %794 = vmatprep.subr.mxu0 0.0
    %795 = vmatpush1.msra.mxu0 0.0
    %796 = vmatprep.subr.mxu0 0.0
    %797 = vmatpush1.msra.mxu0 0.0
    %798 = vmatprep.subr.mxu0 0.0
    %799 = vmatpush1.msra.mxu0 0.0
    %800 = vmatprep.subr.mxu0 0.0
    %801 = vmatpush1.msra.mxu0 0.0
    %802 = vmatprep.subr.mxu0 0.0
    %803 = vmatpush1.msra.mxu0 0.0
    %804 = vmatprep.subr.mxu0 0.0
    %805 = vmatpush1.msra.mxu0 0.0
    %806 = vmatprep.subr.mxu0 0.0
    %807 = vmatpush1.msra.mxu0 0.0
    %808 = vmatprep.subr.mxu0 0.0
    %809 = vmatpush1.msra.mxu0 0.0
    %810 = vmatprep.subr.mxu0 0.0
    %811 = vmatpush1.msra.mxu0 0.0
    %812 = vmatprep.subr.mxu0 0.0
    %813 = vmatpush1.msra.mxu0 0.0
    %814 = vmatprep.subr.mxu0 0.0
    %815 = vmatpush1.msra.mxu0 0.0
    %816 = vmatprep.subr.mxu0 0.0
    %817 = vmatpush1.msra.mxu0 0.0
    %818 = vmatprep.subr.mxu0 0.0
    %819 = vmatpush1.msra.mxu0 0.0
    %820 = vmatprep.subr.mxu0 0.0
    %821 = vmatpush1.msra.mxu0 0.0
    %822 = vmatprep.subr.mxu0 0.0
    %823 = vmatpush1.msra.mxu0 0.0
    %824 = vmatprep.mubr.f32.mxu0 0.0
    %v825 = vand.u32 %v548, 4294901760
    %v826 = vsub.f32 %v548, %v825
    %827 = vmatmul.mubr.f32.gmra.mrb[0].mxu0 %v826
    %v828 = vpop.f32.mrb[0].mxu0
    %v829 = vadd.f32 %v741, %v828
    %v830 = vpop.f32.mrb[0].mxu0
    %831 = vdwg.mxu0
    %832 = vmatprep.subr.mxu0 0.0
    %v833 = vand.u32 %v533, 4294901760
    %834 = vmatpush1.msra.mxu0 %v833
    %835 = vmatprep.subr.mxu0 0.0
    %v836 = vand.u32 %v534, 4294901760
    %837 = vmatpush1.msra.mxu0 %v836
    %838 = vmatprep.subr.mxu0 0.0
    %v839 = vand.u32 %v535, 4294901760
    %840 = vmatpush1.msra.mxu0 %v839
    %841 = vmatprep.subr.mxu0 0.0
    %v842 = vand.u32 %v536, 4294901760
    %843 = vmatpush1.msra.mxu0 %v842
    %844 = vmatprep.subr.mxu0 0.0
    %v845 = vand.u32 %v537, 4294901760
    %846 = vmatpush1.msra.mxu0 %v845
    %847 = vmatprep.subr.mxu0 0.0
    %v848 = vand.u32 %v538, 4294901760
    %849 = vmatpush1.msra.mxu0 %v848
    %850 = vmatprep.subr.mxu0 0.0
    %v851 = vand.u32 %v539, 4294901760
    %852 = vmatpush1.msra.mxu0 %v851
    %853 = vmatprep.subr.mxu0 0.0
    %v854 = vand.u32 %v540, 4294901760
    %855 = vmatpush1.msra.mxu0 %v854
    %856 = vmatprep.subr.mxu0 0.0
    %857 = vmatpush1.msra.mxu0 0.0
    %858 = vmatprep.subr.mxu0 0.0
    %859 = vmatpush1.msra.mxu0 0.0
    %860 = vmatprep.subr.mxu0 0.0
    %861 = vmatpush1.msra.mxu0 0.0
    %862 = vmatprep.subr.mxu0 0.0
    %863 = vmatpush1.msra.mxu0 0.0
    %864 = vmatprep.subr.mxu0 0.0
    %865 = vmatpush1.msra.mxu0 0.0
    %866 = vmatprep.subr.mxu0 0.0
    %867 = vmatpush1.msra.mxu0 0.0
    %868 = vmatprep.subr.mxu0 0.0
    %869 = vmatpush1.msra.mxu0 0.0
    %870 = vmatprep.subr.mxu0 0.0
    %871 = vmatpush1.msra.mxu0 0.0
    %872 = vmatprep.subr.mxu0 0.0
    %873 = vmatpush1.msra.mxu0 0.0
    %874 = vmatprep.subr.mxu0 0.0
    %875 = vmatpush1.msra.mxu0 0.0
    %876 = vmatprep.subr.mxu0 0.0
    %877 = vmatpush1.msra.mxu0 0.0
    %878 = vmatprep.subr.mxu0 0.0
    %879 = vmatpush1.msra.mxu0 0.0
    %880 = vmatprep.subr.mxu0 0.0
    %881 = vmatpush1.msra.mxu0 0.0
    %882 = vmatprep.subr.mxu0 0.0
    %883 = vmatpush1.msra.mxu0 0.0
    %884 = vmatprep.subr.mxu0 0.0
    %885 = vmatpush1.msra.mxu0 0.0
    %886 = vmatprep.subr.mxu0 0.0
    %887 = vmatpush1.msra.mxu0 0.0
    %888 = vmatprep.subr.mxu0 0.0
    %889 = vmatpush1.msra.mxu0 0.0
    %890 = vmatprep.subr.mxu0 0.0
    %891 = vmatpush1.msra.mxu0 0.0
    %892 = vmatprep.subr.mxu0 0.0
    %893 = vmatpush1.msra.mxu0 0.0
    %894 = vmatprep.subr.mxu0 0.0
    %895 = vmatpush1.msra.mxu0 0.0
    %896 = vmatprep.subr.mxu0 0.0
    %897 = vmatpush1.msra.mxu0 0.0
    %898 = vmatprep.subr.mxu0 0.0
    %899 = vmatpush1.msra.mxu0 0.0
    %900 = vmatprep.subr.mxu0 0.0
    %901 = vmatpush1.msra.mxu0 0.0
    %902 = vmatprep.subr.mxu0 0.0
    %903 = vmatpush1.msra.mxu0 0.0
    %904 = vmatprep.mubr.f32.mxu0 0.0
    %v905 = vand.u32 %v548, 4294901760
    %v906 = vsub.f32 %v548, %v905
    %v907 = vand.u32 %v906, 4294901760
    %908 = vmatmul.mubr.f32.gmra.mrb[0].mxu0 %v907
    %v909 = vpop.f32.mrb[0].mxu0
    %v910 = vadd.f32 %v829, %v909
    %v911 = vpop.f32.mrb[0].mxu0
    %912 = vdwg.mxu0
    %913 = vmatprep.subr.mxu0 0.0
    %v914 = vand.u32 %v533, 4294901760
    %v915 = vsub.f32 %v533, %v914
    %v916 = vand.u32 %v915, 4294901760
    %917 = vmatpush1.msra.mxu0 %v916
    %918 = vmatprep.subr.mxu0 0.0
    %v919 = vand.u32 %v534, 4294901760
    %v920 = vsub.f32 %v534, %v919
    %v921 = vand.u32 %v920, 4294901760
    %922 = vmatpush1.msra.mxu0 %v921
    %923 = vmatprep.subr.mxu0 0.0
    %v924 = vand.u32 %v535, 4294901760
    %v925 = vsub.f32 %v535, %v924
    %v926 = vand.u32 %v925, 4294901760
    %927 = vmatpush1.msra.mxu0 %v926
    %928 = vmatprep.subr.mxu0 0.0
    %v929 = vand.u32 %v536, 4294901760
    %v930 = vsub.f32 %v536, %v929
    %v931 = vand.u32 %v930, 4294901760
    %932 = vmatpush1.msra.mxu0 %v931
    %933 = vmatprep.subr.mxu0 0.0
    %v934 = vand.u32 %v537, 4294901760
    %v935 = vsub.f32 %v537, %v934
    %v936 = vand.u32 %v935, 4294901760
    %937 = vmatpush1.msra.mxu0 %v936
    %938 = vmatprep.subr.mxu0 0.0
    %v939 = vand.u32 %v538, 4294901760
    %v940 = vsub.f32 %v538, %v939
    %v941 = vand.u32 %v940, 4294901760
    %942 = vmatpush1.msra.mxu0 %v941
    %943 = vmatprep.subr.mxu0 0.0
    %v944 = vand.u32 %v539, 4294901760
    %v945 = vsub.f32 %v539, %v944
    %v946 = vand.u32 %v945, 4294901760
    %947 = vmatpush1.msra.mxu0 %v946
    %948 = vmatprep.subr.mxu0 0.0
    %v949 = vand.u32 %v540, 4294901760
    %v950 = vsub.f32 %v540, %v949
    %v951 = vand.u32 %v950, 4294901760
    %952 = vmatpush1.msra.mxu0 %v951
    %953 = vmatprep.subr.mxu0 0.0
    %954 = vmatpush1.msra.mxu0 0.0
    %955 = vmatprep.subr.mxu0 0.0
    %956 = vmatpush1.msra.mxu0 0.0
    %957 = vmatprep.subr.mxu0 0.0
    %958 = vmatpush1.msra.mxu0 0.0
    %959 = vmatprep.subr.mxu0 0.0
    %960 = vmatpush1.msra.mxu0 0.0
    %961 = vmatprep.subr.mxu0 0.0
    %962 = vmatpush1.msra.mxu0 0.0
    %963 = vmatprep.subr.mxu0 0.0
    %964 = vmatpush1.msra.mxu0 0.0
    %965 = vmatprep.subr.mxu0 0.0
    %966 = vmatpush1.msra.mxu0 0.0
    %967 = vmatprep.subr.mxu0 0.0
    %968 = vmatpush1.msra.mxu0 0.0
    %969 = vmatprep.subr.mxu0 0.0
    %970 = vmatpush1.msra.mxu0 0.0
    %971 = vmatprep.subr.mxu0 0.0
    %972 = vmatpush1.msra.mxu0 0.0
    %973 = vmatprep.subr.mxu0 0.0
    %974 = vmatpush1.msra.mxu0 0.0
    %975 = vmatprep.subr.mxu0 0.0
    %976 = vmatpush1.msra.mxu0 0.0
    %977 = vmatprep.subr.mxu0 0.0
    %978 = vmatpush1.msra.mxu0 0.0
    %979 = vmatprep.subr.mxu0 0.0
    %980 = vmatpush1.msra.mxu0 0.0
    %981 = vmatprep.subr.mxu0 0.0
    %982 = vmatpush1.msra.mxu0 0.0
    %983 = vmatprep.subr.mxu0 0.0
    %984 = vmatpush1.msra.mxu0 0.0
    %985 = vmatprep.subr.mxu0 0.0
    %986 = vmatpush1.msra.mxu0 0.0
    %987 = vmatprep.subr.mxu0 0.0
    %988 = vmatpush1.msra.mxu0 0.0
    %989 = vmatprep.subr.mxu0 0.0
    %990 = vmatpush1.msra.mxu0 0.0
    %991 = vmatprep.subr.mxu0 0.0
    %992 = vmatpush1.msra.mxu0 0.0
    %993 = vmatprep.subr.mxu0 0.0
    %994 = vmatpush1.msra.mxu0 0.0
    %995 = vmatprep.subr.mxu0 0.0
    %996 = vmatpush1.msra.mxu0 0.0
    %997 = vmatprep.subr.mxu0 0.0
    %998 = vmatpush1.msra.mxu0 0.0
    %999 = vmatprep.subr.mxu0 0.0
    %1000 = vmatpush1.msra.mxu0 0.0
    %1001 = vmatprep.mubr.f32.mxu0 0.0
    %v1002 = vand.u32 %v548, 4294901760
    %1003 = vmatmul.mubr.f32.gmra.mrb[0].mxu0 %v1002
    %v1004 = vpop.f32.mrb[0].mxu0
    %v1005 = vadd.f32 %v910, %v1004
    %v1006 = vpop.f32.mrb[0].mxu0
    %1007 = vdwg.mxu0
    %1008 = vmatprep.subr.mxu0 0.0
    %v1009 = vand.u32 %v533, 4294901760
    %1010 = vmatpush1.msra.mxu0 %v1009
    %1011 = vmatprep.subr.mxu0 0.0
    %v1012 = vand.u32 %v534, 4294901760
    %1013 = vmatpush1.msra.mxu0 %v1012
    %1014 = vmatprep.subr.mxu0 0.0
    %v1015 = vand.u32 %v535, 4294901760
    %1016 = vmatpush1.msra.mxu0 %v1015
    %1017 = vmatprep.subr.mxu0 0.0
    %v1018 = vand.u32 %v536, 4294901760
    %1019 = vmatpush1.msra.mxu0 %v1018
    %1020 = vmatprep.subr.mxu0 0.0
    %v1021 = vand.u32 %v537, 4294901760
    %1022 = vmatpush1.msra.mxu0 %v1021
    %1023 = vmatprep.subr.mxu0 0.0
    %v1024 = vand.u32 %v538, 4294901760
    %1025 = vmatpush1.msra.mxu0 %v1024
    %1026 = vmatprep.subr.mxu0 0.0
    %v1027 = vand.u32 %v539, 4294901760
    %1028 = vmatpush1.msra.mxu0 %v1027
    %1029 = vmatprep.subr.mxu0 0.0
    %v1030 = vand.u32 %v540, 4294901760
    %1031 = vmatpush1.msra.mxu0 %v1030
    %1032 = vmatprep.subr.mxu0 0.0
    %1033 = vmatpush1.msra.mxu0 0.0
    %1034 = vmatprep.subr.mxu0 0.0
    %1035 = vmatpush1.msra.mxu0 0.0
    %1036 = vmatprep.subr.mxu0 0.0
    %1037 = vmatpush1.msra.mxu0 0.0
    %1038 = vmatprep.subr.mxu0 0.0
    %1039 = vmatpush1.msra.mxu0 0.0
    %1040 = vmatprep.subr.mxu0 0.0
    %1041 = vmatpush1.msra.mxu0 0.0
    %1042 = vmatprep.subr.mxu0 0.0
    %1043 = vmatpush1.msra.mxu0 0.0
    %1044 = vmatprep.subr.mxu0 0.0
    %1045 = vmatpush1.msra.mxu0 0.0
    %1046 = vmatprep.subr.mxu0 0.0
    %1047 = vmatpush1.msra.mxu0 0.0
    %1048 = vmatprep.subr.mxu0 0.0
    %1049 = vmatpush1.msra.mxu0 0.0
    %1050 = vmatprep.subr.mxu0 0.0
    %1051 = vmatpush1.msra.mxu0 0.0
    %1052 = vmatprep.subr.mxu0 0.0
    %1053 = vmatpush1.msra.mxu0 0.0
    %1054 = vmatprep.subr.mxu0 0.0
    %1055 = vmatpush1.msra.mxu0 0.0
    %1056 = vmatprep.subr.mxu0 0.0
    %1057 = vmatpush1.msra.mxu0 0.0
    %1058 = vmatprep.subr.mxu0 0.0
    %1059 = vmatpush1.msra.mxu0 0.0
    %1060 = vmatprep.subr.mxu0 0.0
    %1061 = vmatpush1.msra.mxu0 0.0
    %1062 = vmatprep.subr.mxu0 0.0
    %1063 = vmatpush1.msra.mxu0 0.0
    %1064 = vmatprep.subr.mxu0 0.0
    %1065 = vmatpush1.msra.mxu0 0.0
    %1066 = vmatprep.subr.mxu0 0.0
    %1067 = vmatpush1.msra.mxu0 0.0
    %1068 = vmatprep.subr.mxu0 0.0
    %1069 = vmatpush1.msra.mxu0 0.0
    %1070 = vmatprep.subr.mxu0 0.0
    %1071 = vmatpush1.msra.mxu0 0.0
    %1072 = vmatprep.subr.mxu0 0.0
    %1073 = vmatpush1.msra.mxu0 0.0
    %1074 = vmatprep.subr.mxu0 0.0
    %1075 = vmatpush1.msra.mxu0 0.0
    %1076 = vmatprep.subr.mxu0 0.0
    %1077 = vmatpush1.msra.mxu0 0.0
    %1078 = vmatprep.subr.mxu0 0.0
    %1079 = vmatpush1.msra.mxu0 0.0
    %1080 = vmatprep.mubr.f32.mxu0 0.0
    %v1081 = vand.u32 %v548, 4294901760
    %1082 = vmatmul.mubr.f32.gmra.mrb[0].mxu0 %v1081
    %v1083 = vpop.f32.mrb[0].mxu0
    %v1084 = vadd.f32 %v1005, %v1083
    %v1085 = vpop.f32.mrb[0].mxu0
    %1086 = vdwg.mxu0
    %v1087 = vxor.u32 %v1084, 2147483648
    %v1088 = vmul.f32 %v1087, 1.442695
    %v1089 = vpow.pop %v1088
    %v1090 = vadd.f32 %v1089, 1.0
    %v1091 = vrcp.pop %v1090
    %v1092 = vmul.f32 1.0, %v1091
    %v1093 = vmul.f32 %v1084, %v1092
    %v1094 = vld [vmem:[%s4 + $0x1] sm:$0x1]
    %v1095 = vlaneseq
    %v1096 = vshrl.u32 %v1095, 7
    %v1097 = vsub.s32 0, %v1096
    %v1098 = vrot.slane %v1094, %v1097
    %v1099 = vadd.f32 %v1093, %v1098
    %vm1100 = vcmask 130048
    %1101 = vst.msk [vmem:[#allocation2] sm:$0xff] %vm1100, %v1099
    // Predicated region
    $region22: #{tpu_custom_call.1} parent=1 // pred_check
      _
    $region23: #{tpu_custom_call.1} parent=1 // pred_check_branch
      %1103 = sbr.rel (0) target = $region25
    $region24: #{tpu_custom_call.1} parent=1 // pred_region
      %s1105 = ssub.s32 128, 128
      %1106 = vsyncadd [#allocation3], %s1105
      %s1108 = sshll.u32 [#allocation2], 4
      %s1109 = int_to_ptr.vmem [resolvable:$true] %s1108
      %1111 = dma.vmem_to_hbm [thread:$0]  %s1109, 128, %s5, [#allocation3]
    $region25: #{tpu_custom_call.1} parent=1 // pred_fallthru
      _
    // Predicated region
    $region26: #{tpu_custom_call.1} parent=1 // pred_check
      _
    $region27: #{tpu_custom_call.1} parent=1 // pred_check_branch
      %1113 = sbr.rel (0) target = $region29
    $region28: #{tpu_custom_call.1} parent=1 // pred_region
      %1114 = dma.done [#allocation3], 128
    $region29: #{tpu_custom_call.1} parent=1 // pred_fallthru
      _
    %1115 = vsyncpa [#allocation3], 1

</llo_original>
